<compile_context>
chip_gen: v5e
topology: v5e:2x2
jax: 0.10.0
libtpu: 0.0.40
codegen_flags: <defaults>
</compile_context>

<pallas_src>
import numpy as np
import jax
import jax.numpy as jnp
from jax.experimental import pallas as pl
from jax.experimental.pallas import tpu as pltpu

PAD = 128  # lane-dense padded hidden/output width (all real widths here <= 128)


def _round_up(x: int, m: int) -> int:
    return ((x + m - 1) // m) * m


def _cdiv(a: int, b: int) -> int:
    return (a + b - 1) // b


def _layer_dims(n_feats: int, n_tasks: int):
    """Reproduce the layer-size schedule from RegressionModel.__init__."""
    dims = []
    n = n_feats
    while n > n_tasks:
        dims.append((n, n // 2))
        n = n // 2
    dims.append((n, n_tasks))
    return dims


def _make_fnn_kernel(num_layers: int, n_feats_in: int):
    """Whole-model kernel: chained matmul + bias (+ tanh except last layer)."""

    def kernel(x_ref, w_ref, b_ref, o_ref):
        # Layer 0: native-width activations vs. statically sliced first weight.
        x = x_ref[...].astype(jnp.bfloat16)                     # (tb, n_feats_in)
        y = jnp.dot(x, w_ref[0, :n_feats_in, :],                # (n_feats_in, 128) bf16
                    preferred_element_type=jnp.float32) + b_ref[0]
        for l in range(1, num_layers):                          # static unroll
            y = jnp.tanh(y)                                     # f32 (EUP); tanh(0)=0 keeps padding exact
            y = jnp.dot(y.astype(jnp.bfloat16), w_ref[l],
                        preferred_element_type=jnp.float32) + b_ref[l]
        o_ref[...] = y.astype(o_ref.dtype)

    return kernel


def pack_params(weights, biases):
    """Pack per-layer weights/biases into zero-padded slabs.  Call ONCE and reuse.

    weights : list of (in, out) arrays (already transposed vs torch layout)
    biases  : list of (out,) arrays
    """
    num_layers = len(weights)
    n_feats = int(weights[0].shape[0])
    n_tasks = int(weights[-1].shape[1])
    n_feats_in = _round_up(n_feats, 8)          # sublane-aligned kernel input width
    assert n_feats_in <= PAD and all(int(w.shape[1]) <= PAD for w in weights)

    w_np = np.zeros((num_layers, PAD, PAD), np.float32)
    b_np = np.zeros((num_layers, 1, PAD), np.float32)
    for l, (w, b) in enumerate(zip(weights, biases)):
        d_in, d_out = int(w.shape[0]), int(w.shape[1])
        w_np[l, :d_in, :d_out] = np.asarray(w, np.float32)
        b_np[l, 0, :d_out] = np.asarray(b, np.float32)

    return {
        "w_slab": jnp.asarray(w_np, dtype=jnp.bfloat16),  # bf16 MXU operands
        "b_slab": jnp.asarray(b_np, dtype=jnp.float32),   # bias add stays f32
        "num_layers": num_layers,
        "n_feats": n_feats,
        "n_feats_in": n_feats_in,
        "n_tasks": n_tasks,
    }


def _choose_tile(batch: int, tile_batch: int):
    """8-aligned batch tile + grid length; prefers an even grid (v7x: 2 TCs)."""
    if batch <= 256:
        return batch, 1                         # one tile; block == full array dim
    grid_n = max(2, _cdiv(batch, tile_batch))
    if grid_n % 2:                              # balance across v7x's two cores
        grid_n += 1
    tb = _round_up(_cdiv(batch, grid_n), 8)
    return tb, _cdiv(batch, tb)


def fnn_forward(x, params, *, tile_batch=1024):
    """RegressionModel forward as a single Pallas kernel.

    x      : (batch, n_feats) array
    params : output of pack_params (packed once, reused every call)
    returns: (batch, n_tasks) float32
    """
    batch, n_feats = x.shape
    assert n_feats == params["n_feats"]
    num_layers = params["num_layers"]
    n_feats_in = params["n_feats_in"]
    n_tasks = params["n_tasks"]
    w_slab, b_slab = params["w_slab"], params["b_slab"]

    x = x.astype(jnp.float32)
    if n_feats != n_feats_in:                   # only if n_feats % 8 != 0 (tiny pad)
        x = jnp.pad(x, ((0, 0), (0, n_feats_in - n_feats)))

    tb, grid_n = _choose_tile(batch, tile_batch)

    cost = pl.CostEstimate(
        flops=2 * batch * PAD * PAD * num_layers,
        transcendentals=batch * PAD * max(num_layers - 1, 0),
        bytes_accessed=(batch * n_feats_in * 4 + batch * PAD * 4
                        + int(w_slab.size) * 2 + int(b_slab.size) * 4),
    )

    out_pad = pl.pallas_call(
        _make_fnn_kernel(num_layers, n_feats_in),
        out_shape=jax.ShapeDtypeStruct((batch, PAD), jnp.float32),
        grid=(grid_n,),
        in_specs=[
            # x tile streams along the batch grid axis at native feature width.
            pl.BlockSpec((tb, n_feats_in), lambda i: (i, 0)),
            # Parameter slabs: constant index_map -> VMEM-resident across steps.
            pl.BlockSpec((num_layers, PAD, PAD), lambda i: (0, 0, 0)),
            pl.BlockSpec((num_layers, 1, PAD), lambda i: (0, 0, 0)),
        ],
        out_specs=pl.BlockSpec((tb, PAD), lambda i: (i, 0)),
        compiler_params=pltpu.CompilerParams(
            dimension_semantics=("parallel",),   # rows independent; v7x splits tiles
        ),
        cost_estimate=cost,
    )(x, w_slab, b_slab)

    # Lane-dense kernel output -> slice the real task columns in the wrapper.
    return out_pad[:, :n_tasks]


# ----------------------------- test helpers ---------------------------------

def _init_params(key, n_feats, n_tasks):
    """Deterministic init mimicking torch.nn.Linear default U[-1/sqrt(in), 1/sqrt(in)]."""
    dims = _layer_dims(n_feats, n_tasks)
    weights, biases = [], []
    for (d_in, d_out) in dims:
        key, kw, kb = jax.random.split(key, 3)
        bound = 1.0 / float(np.sqrt(d_in))
        w = jax.random.uniform(kw, (d_in, d_out), jnp.float32, -bound, bound)
        b = jax.random.uniform(kb, (d_out,), jnp.float32, -bound, bound)
        weights.append(w)
        biases.append(b)
    return weights, biases


def _reference_forward_f32(x, weights, biases):
    """Pure-JAX f32 reference matching the PyTorch forward semantics."""
    y = x.astype(jnp.float32)
    n = len(weights)
    for i, (w, b) in enumerate(zip(weights, biases)):
        y = y @ w + b
        if i < n - 1:
            y = jnp.tanh(y)
    return y


def _reference_forward_bf16(x, weights, biases):
    """Matches kernel numerics: bf16 matmul operands, f32 accumulate/bias/tanh."""
    y = x.astype(jnp.float32)
    n = len(weights)
    for i, (w, b) in enumerate(zip(weights, biases)):
        y = jnp.dot(y.astype(jnp.bfloat16), w.astype(jnp.bfloat16),
                    preferred_element_type=jnp.float32) + b.astype(jnp.float32)
        if i < n - 1:
            y = jnp.tanh(y)
    return y


if __name__ == "__main__":
    # Small shapes consistent with the module:
    #   n_feats=32, n_tasks=4  ->  layers: 32->16->8->4 then 4->4
    batch, n_feats, n_tasks = 2, 32, 4

    key = jax.random.PRNGKey(0)
    key, kx = jax.random.split(key)
    x = jax.random.normal(kx, (batch, n_feats), dtype=jnp.float32)

    weights, biases = _init_params(key, n_feats, n_tasks)
    params = pack_params(weights, biases)        # packed once, reused per forward

    out = jax.block_until_ready(fnn_forward(x, params))
    assert out.shape == (batch, n_tasks)
    assert jnp.allclose(out, _reference_forward_bf16(x, weights, biases),
                        atol=1e-3, rtol=1e-3), "mismatch vs bf16-math reference"
    assert jnp.allclose(out, _reference_forward_f32(x, weights, biases),
                        atol=5e-2, rtol=5e-2), "mismatch vs f32 reference"

    # Multi-tile path: even grid (2 tiles of 520 rows), ragged last tile.
    key, kx2 = jax.random.split(key)
    x_big = jax.random.normal(kx2, (1030, n_feats), dtype=jnp.float32)
    out_big = jax.block_until_ready(fnn_forward(x_big, params))
    assert out_big.shape == (1030, n_tasks)
    assert jnp.allclose(out_big, _reference_forward_bf16(x_big, weights, biases),
                        atol=1e-3, rtol=1e-3), "tiled mismatch vs bf16-math reference"
    assert jnp.allclose(out_big, _reference_forward_f32(x_big, weights, biases),
                        atol=5e-2, rtol=5e-2), "tiled mismatch vs f32 reference"

    print("KERNEL_OK")
</pallas_src>

<mosaic_0001>
module attributes {stable_mosaic.version = 11 : i64} {
  func.func @kernel(%arg0: i32, %arg1: memref<2x32xf32, #tpu.memory_space<vmem>>, %arg2: memref<4x128x128xbf16, #tpu.memory_space<vmem>>, %arg3: memref<4x1x128xf32, #tpu.memory_space<vmem>>, %arg4: memref<2x128xf32, #tpu.memory_space<vmem>>) attributes {dimension_semantics = [#tpu.dimension_semantics<parallel>], iteration_bounds = array<i64: 1>, scalar_prefetch = 0 : i64, scratch_operands = 0 : i64, tpu.core_type = #tpu.core_type<tc>, window_params = [{transform_indices = @transform_0, window_bounds = array<i64: 2, 32>}, {pipeline_mode = #tpu.pipeline_mode<synchronous>, transform_indices = @transform_1, window_bounds = array<i64: 4, 128, 128>}, {pipeline_mode = #tpu.pipeline_mode<synchronous>, transform_indices = @transform_2, window_bounds = array<i64: 4, 1, 128>}, {transform_indices = @transform_3, window_bounds = array<i64: 2, 128>}]} {
    %c0 = arith.constant 0 : index
    %c0_0 = arith.constant 0 : index
    %0 = vector.load %arg1[%c0, %c0_0] : memref<2x32xf32, #tpu.memory_space<vmem>>, vector<2x32xf32>
    %1 = arith.truncf %0 : vector<2x32xf32> to vector<2x32xbf16>
    %c0_1 = arith.constant 0 : index
    %c0_2 = arith.constant 0 : index
    %c0_3 = arith.constant 0 : index
    %2 = vector.load %arg2[%c0_1, %c0_2, %c0_3] : memref<4x128x128xbf16, #tpu.memory_space<vmem>>, vector<1x32x128xbf16>
    %3 = vector.shape_cast %2 : vector<1x32x128xbf16> to vector<32x128xbf16>
    %cst = arith.constant dense<0.000000e+00> : vector<2x128xf32>
    %4 = tpu.matmul %1, %3, %cst {dimension_numbers = #tpu.dot_dimension_numbers<[1], [0], [0], [1], [0, 0, 1, 1], [], []>} : vector<2x32xbf16>, vector<32x128xbf16>, vector<2x128xf32> -> vector<2x128xf32>
    %c0_4 = arith.constant 0 : index
    %c0_5 = arith.constant 0 : index
    %c0_6 = arith.constant 0 : index
    %5 = vector.load %arg3[%c0_4, %c0_5, %c0_6] : memref<4x1x128xf32, #tpu.memory_space<vmem>>, vector<1x1x128xf32>
    %6 = vector.shape_cast %5 : vector<1x1x128xf32> to vector<1x128xf32>
    %7 = vector.broadcast %6 : vector<1x128xf32> to vector<2x128xf32>
    %8 = arith.addf %4, %7 : vector<2x128xf32>
    %9 = math.tanh %8 : vector<2x128xf32>
    %10 = arith.truncf %9 : vector<2x128xf32> to vector<2x128xbf16>
    %c1 = arith.constant 1 : index
    %c0_7 = arith.constant 0 : index
    %c0_8 = arith.constant 0 : index
    %11 = vector.load %arg2[%c1, %c0_7, %c0_8] : memref<4x128x128xbf16, #tpu.memory_space<vmem>>, vector<1x128x128xbf16>
    %12 = vector.shape_cast %11 : vector<1x128x128xbf16> to vector<128x128xbf16>
    %cst_9 = arith.constant dense<0.000000e+00> : vector<2x128xf32>
    %13 = tpu.matmul %10, %12, %cst_9 {dimension_numbers = #tpu.dot_dimension_numbers<[1], [0], [0], [1], [0, 0, 1, 1], [], []>} : vector<2x128xbf16>, vector<128x128xbf16>, vector<2x128xf32> -> vector<2x128xf32>
    %c1_10 = arith.constant 1 : index
    %c0_11 = arith.constant 0 : index
    %c0_12 = arith.constant 0 : index
    %14 = vector.load %arg3[%c1_10, %c0_11, %c0_12] : memref<4x1x128xf32, #tpu.memory_space<vmem>>, vector<1x1x128xf32>
    %15 = vector.shape_cast %14 : vector<1x1x128xf32> to vector<1x128xf32>
    %16 = vector.broadcast %15 : vector<1x128xf32> to vector<2x128xf32>
    %17 = arith.addf %13, %16 : vector<2x128xf32>
    %18 = math.tanh %17 : vector<2x128xf32>
    %19 = arith.truncf %18 : vector<2x128xf32> to vector<2x128xbf16>
    %c2 = arith.constant 2 : index
    %c0_13 = arith.constant 0 : index
    %c0_14 = arith.constant 0 : index
    %20 = vector.load %arg2[%c2, %c0_13, %c0_14] : memref<4x128x128xbf16, #tpu.memory_space<vmem>>, vector<1x128x128xbf16>
    %21 = vector.shape_cast %20 : vector<1x128x128xbf16> to vector<128x128xbf16>
    %cst_15 = arith.constant dense<0.000000e+00> : vector<2x128xf32>
    %22 = tpu.matmul %19, %21, %cst_15 {dimension_numbers = #tpu.dot_dimension_numbers<[1], [0], [0], [1], [0, 0, 1, 1], [], []>} : vector<2x128xbf16>, vector<128x128xbf16>, vector<2x128xf32> -> vector<2x128xf32>
    %c2_16 = arith.constant 2 : index
    %c0_17 = arith.constant 0 : index
    %c0_18 = arith.constant 0 : index
    %23 = vector.load %arg3[%c2_16, %c0_17, %c0_18] : memref<4x1x128xf32, #tpu.memory_space<vmem>>, vector<1x1x128xf32>
    %24 = vector.shape_cast %23 : vector<1x1x128xf32> to vector<1x128xf32>
    %25 = vector.broadcast %24 : vector<1x128xf32> to vector<2x128xf32>
    %26 = arith.addf %22, %25 : vector<2x128xf32>
    %27 = math.tanh %26 : vector<2x128xf32>
    %28 = arith.truncf %27 : vector<2x128xf32> to vector<2x128xbf16>
    %c3 = arith.constant 3 : index
    %c0_19 = arith.constant 0 : index
    %c0_20 = arith.constant 0 : index
    %29 = vector.load %arg2[%c3, %c0_19, %c0_20] : memref<4x128x128xbf16, #tpu.memory_space<vmem>>, vector<1x128x128xbf16>
    %30 = vector.shape_cast %29 : vector<1x128x128xbf16> to vector<128x128xbf16>
    %cst_21 = arith.constant dense<0.000000e+00> : vector<2x128xf32>
    %31 = tpu.matmul %28, %30, %cst_21 {dimension_numbers = #tpu.dot_dimension_numbers<[1], [0], [0], [1], [0, 0, 1, 1], [], []>} : vector<2x128xbf16>, vector<128x128xbf16>, vector<2x128xf32> -> vector<2x128xf32>
    %c3_22 = arith.constant 3 : index
    %c0_23 = arith.constant 0 : index
    %c0_24 = arith.constant 0 : index
    %32 = vector.load %arg3[%c3_22, %c0_23, %c0_24] : memref<4x1x128xf32, #tpu.memory_space<vmem>>, vector<1x1x128xf32>
    %33 = vector.shape_cast %32 : vector<1x1x128xf32> to vector<1x128xf32>
    %34 = vector.broadcast %33 : vector<1x128xf32> to vector<2x128xf32>
    %35 = arith.addf %31, %34 : vector<2x128xf32>
    %c0_25 = arith.constant 0 : index
    %c0_26 = arith.constant 0 : index
    %36 = vector.load %arg4[%c0_25, %c0_26] : memref<2x128xf32, #tpu.memory_space<vmem>>, vector<2x128xf32>
    tpu.vector_store %arg4[%c0_25, %c0_26], %35 {strides = array<i32>} : memref<2x128xf32, #tpu.memory_space<vmem>>, vector<2x128xf32>,
    return
  }
  func.func @transform_0(%arg0: i32) -> (i32, i32) {
    %c0_i32 = arith.constant 0 : i32
    %c0_i32_0 = arith.constant 0 : i32
    return %arg0, %c0_i32 : i32, i32
  }
  func.func @transform_1(%arg0: i32) -> (i32, i32, i32) {
    %c0_i32 = arith.constant 0 : i32
    %c0_i32_0 = arith.constant 0 : i32
    %c0_i32_1 = arith.constant 0 : i32
    %c0_i32_2 = arith.constant 0 : i32
    return %c0_i32, %c0_i32_0, %c0_i32_1 : i32, i32, i32
  }
  func.func @transform_2(%arg0: i32) -> (i32, i32, i32) {
    %c0_i32 = arith.constant 0 : i32
    %c0_i32_0 = arith.constant 0 : i32
    %c0_i32_1 = arith.constant 0 : i32
    %c0_i32_2 = arith.constant 0 : i32
    return %c0_i32, %c0_i32_0, %c0_i32_1 : i32, i32, i32
  }
  func.func @transform_3(%arg0: i32) -> (i32, i32) {
    %c0_i32 = arith.constant 0 : i32
    %c0_i32_0 = arith.constant 0 : i32
    return %arg0, %c0_i32 : i32, i32
  }
}

</mosaic_0001>

<llo_original>
// kernel: tpu_custom_call.1
$region0: #{tpu_custom_call.1}
  #allocation0 [shape = 'u32[]', space=smem, size = 0x4, offset = 0x4, fixed_abs, tag = 'smem constant byte address 0x4 - core index']
  #allocation1 [shape = 'u32[72,128]{1,0:T(1,128)}', space=vmem, size = 0x9000, scoped, tag = 'internal scratch']
  %s0 = inlined_call_operand.hbm [shape: f32[2,32], index: 0, kind: input, shape index: {}]
  %s1 = inlined_call_operand.hbm [shape: bf16[4,128,128], index: 1, kind: input, shape index: {}]
  %s2 = inlined_call_operand.hbm [shape: f32[4,1,128], index: 2, kind: input, shape index: {}]
  %s3 = inlined_call_operand.hbm [shape: f32[2,128], index: 3, kind: output, shape index: {}]
  %s4 = sld [smem:[#allocation0]]
  $region34: #{tpu_custom_call.1} parent=0
    _
  %s6 = ssub.s32 1, %s4
  %s7 = scalar_select 0, %s6, %s4
  $region1: #{tpu_custom_call.1} parent=0
    #allocation2 [shape = 'u8[1024]{0}', space=vmem, size = 0x400, scoped, tag = 'input window, operand 0, single buffered']
    #allocation3 [shape = 's32[1]{0}', space=sflag, size = 0x4, scoped, tag = 'scoped memory for tpu_custom_call.1']
    #allocation4 [shape = 's32[1]{0}', space=sflag, size = 0x4, scoped, tag = 'scoped memory for tpu_custom_call.1']
    #allocation5 [shape = 'u8[131072]{0}', space=vmem, size = 0x20000, scoped, tag = 'input window, operand 1, single buffered']
    #allocation6 [shape = 's32[1]{0}', space=sflag, size = 0x4, scoped, tag = 'scoped memory for tpu_custom_call.1']
    #allocation7 [shape = 'u8[2048]{0}', space=vmem, size = 0x800, scoped, tag = 'input window, operand 2, single buffered']
    #allocation8 [shape = 'u8[1024]{0}', space=vmem, size = 0x400, scoped, tag = 'output window, operand 0, single buffered']
    %8 = vsyncpa [#allocation3], 0
    %9 = vsyncpa [#allocation6], 0
    %10 = vsyncpa [#allocation4], 0
    // Predicated region
    $region2: #{tpu_custom_call.1} parent=1 // pred_check
      _
    $region3: #{tpu_custom_call.1} parent=1 // pred_check_branch
      %12 = sbr.rel (0) target = $region5
    $region4: #{tpu_custom_call.1} parent=1 // pred_region
      %14 = vsyncadd [#allocation3], 0
      %s16 = sshll.u32 %s0, 4
      %s17 = int_to_ptr.hbm [resolvable:$true] %s16
      %s18 = sshll.u32 [#allocation2], 4
      %s19 = int_to_ptr.vmem [resolvable:$true] %s18
      %21 = dma.hbm_to_vmem [thread:$0]  %s17, 32, %s19, [#allocation3]
    $region5: #{tpu_custom_call.1} parent=1 // pred_fallthru
      _
    // Predicated region
    $region6: #{tpu_custom_call.1} parent=1 // pred_check
      _
    $region7: #{tpu_custom_call.1} parent=1 // pred_check_branch
      %23 = sbr.rel (0) target = $region9
    $region8: #{tpu_custom_call.1} parent=1 // pred_region
      %25 = vsyncadd [#allocation6], 0
      %s26 = sshll.u32 %s1, 4
      %s27 = int_to_ptr.hbm [resolvable:$true] %s26
      %s28 = sshll.u32 [#allocation5], 4
      %s29 = int_to_ptr.vmem [resolvable:$true] %s28
      %34 = dma.hbm_to_vmem [thread:$0]  %s27, 4096, %s29, [#allocation6], 64, 64, 4
    $region9: #{tpu_custom_call.1} parent=1 // pred_fallthru
      _
    // Predicated region
    $region10: #{tpu_custom_call.1} parent=1 // pred_check
      _
    $region11: #{tpu_custom_call.1} parent=1 // pred_check_branch
      %36 = sbr.rel (0) target = $region13
    $region12: #{tpu_custom_call.1} parent=1 // pred_region
      %38 = vsyncadd [#allocation6], 0
      %s39 = sshll.u32 %s2, 4
      %s40 = int_to_ptr.hbm [resolvable:$true] %s39
      %s41 = sshll.u32 [#allocation7], 4
      %s42 = int_to_ptr.vmem [resolvable:$true] %s41
      %47 = dma.hbm_to_vmem [thread:$0]  %s40, 64, %s42, [#allocation6], 16, 16, 1
    $region13: #{tpu_custom_call.1} parent=1 // pred_fallthru
      _
    // Predicated region
    $region14: #{tpu_custom_call.1} parent=1 // pred_check
      _
    $region15: #{tpu_custom_call.1} parent=1 // pred_check_branch
      %49 = sbr.rel (0) target = $region17
    $region16: #{tpu_custom_call.1} parent=1 // pred_region
      %51 = dma.done [#allocation3], 32
    $region17: #{tpu_custom_call.1} parent=1 // pred_fallthru
      _
    // Predicated region
    $region18: #{tpu_custom_call.1} parent=1 // pred_check
      _
    $region19: #{tpu_custom_call.1} parent=1 // pred_check_branch
      %53 = sbr.rel (0) target = $region21
    $region20: #{tpu_custom_call.1} parent=1 // pred_region
      %55 = dma.done [#allocation6], 4096
    $region21: #{tpu_custom_call.1} parent=1 // pred_fallthru
      _
    // Predicated region
    $region22: #{tpu_custom_call.1} parent=1 // pred_check
      _
    $region23: #{tpu_custom_call.1} parent=1 // pred_check_branch
      %57 = sbr.rel (0) target = $region25
    $region24: #{tpu_custom_call.1} parent=1 // pred_region
      %59 = dma.done [#allocation6], 64
    $region25: #{tpu_custom_call.1} parent=1 // pred_fallthru
      _
    %v61 = vld [vmem:[#allocation2] sm:$0x3]
    %v62 = vpack.c.bf16 %v61, %v61
    %v63 = vld [vmem:[#allocation5] sm:$0xf]
    %v64 = vld [vmem:[#allocation5 + $0x4] sm:$0xf]
    %v65 = vld [vmem:[#allocation5 + $0x8] sm:$0xf]
    %v66 = vld [vmem:[#allocation5 + $0xc] sm:$0xf]
    %v67 = vld [vmem:[#allocation7] sm:$0x1]
    %v69 = vperm.slane %v67, 0
    %v75 = vunpack.c.l.b16 %v63
    %v76 = vunpack.c.l.b16 %v64
    %v77 = vunpack.c.l.b16 %v65
    %v78 = vunpack.c.l.b16 %v66
    %v79 = vpack.c.b16 %v76, %v75
    %v80 = vpack.c.b16 %v78, %v77
    %vm83 = vcmask 261120
    %v85 = vsel %vm83, %v62, 0
    %87 = vmatpush.bf16.msra.mxu0 0
    %88 = vmatpush.bf16.msra.mxu0 0
    %89 = vmatpush.bf16.msra.mxu0 0
    %90 = vmatpush.bf16.msra.mxu0 0
    %91 = vmatpush.bf16.msra.mxu0 0
    %92 = vmatpush.bf16.msra.mxu0 0
    %93 = vmatpush.bf16.msra.mxu0 %v80
    %94 = vmatpush.bf16.msra.mxu0 %v79
    %95 = vmatmul.bf16.gmra.mxu0 %v85
    %v96 = vpop.f32.mrf.mxu0
    %v97 = vadd.f32 %v69, %v96
    %v98 = vpop.f32.mrf.mxu0
    %99 = vdwg.mxu0
    %v100 = vtanh.pop %v97
    %v101 = vpack.c.bf16 %v100, %v100
    %s102 = scalar_lea.vmem [#allocation5], 64
    %v103 = vld [vmem:[%s102] sm:$0xf]
    %v104 = vld [vmem:[%s102 + $0x4] sm:$0xf]
    %v105 = vld [vmem:[%s102 + $0x8] sm:$0xf]
    %v106 = vld [vmem:[%s102 + $0xc] sm:$0xf]
    %v107 = vld [vmem:[%s102 + $0x10] sm:$0xf]
    %v108 = vld [vmem:[%s102 + $0x14] sm:$0xf]
    %v109 = vld [vmem:[%s102 + $0x18] sm:$0xf]
    %v110 = vld [vmem:[%s102 + $0x1c] sm:$0xf]
    %v111 = vld [vmem:[%s102 + $0x20] sm:$0xf]
    %v112 = vld [vmem:[%s102 + $0x24] sm:$0xf]
    %v113 = vld [vmem:[%s102 + $0x28] sm:$0xf]
    %v114 = vld [vmem:[%s102 + $0x2c] sm:$0xf]
    %v115 = vld [vmem:[%s102 + $0x30] sm:$0xf]
    %v116 = vld [vmem:[%s102 + $0x34] sm:$0xf]
    %v117 = vld [vmem:[%s102 + $0x38] sm:$0xf]
    %v118 = vld [vmem:[%s102 + $0x3c] sm:$0xf]
    %s119 = scalar_lea.vmem [#allocation7], 1
    %v120 = vld [vmem:[%s119] sm:$0x1]
    %v122 = vperm.slane %v120, 0
    %v140 = vunpack.c.l.b16 %v103
    %v141 = vunpack.c.l.b16 %v104
    %v142 = vunpack.c.l.b16 %v105
    %v143 = vunpack.c.l.b16 %v106
    %v144 = vunpack.c.l.b16 %v107
    %v145 = vunpack.c.l.b16 %v108
    %v146 = vunpack.c.l.b16 %v109
    %v147 = vunpack.c.l.b16 %v110
    %v148 = vunpack.c.l.b16 %v111
    %v149 = vunpack.c.l.b16 %v112
    %v150 = vunpack.c.l.b16 %v113
    %v151 = vunpack.c.l.b16 %v114
    %v152 = vunpack.c.l.b16 %v115
    %v153 = vunpack.c.l.b16 %v116
    %v154 = vunpack.c.l.b16 %v117
    %v155 = vunpack.c.l.b16 %v118
    %v156 = vpack.c.b16 %v141, %v140
    %v157 = vpack.c.b16 %v143, %v142
    %v158 = vpack.c.b16 %v145, %v144
    %v159 = vpack.c.b16 %v147, %v146
    %v160 = vpack.c.b16 %v149, %v148
    %v161 = vpack.c.b16 %v151, %v150
    %v162 = vpack.c.b16 %v153, %v152
    %v163 = vpack.c.b16 %v155, %v154
    %172 = vmatpush.bf16.msra.mxu0 %v163
    %173 = vmatpush.bf16.msra.mxu0 %v162
    %174 = vmatpush.bf16.msra.mxu0 %v161
    %175 = vmatpush.bf16.msra.mxu0 %v160
    %176 = vmatpush.bf16.msra.mxu0 %v159
    %177 = vmatpush.bf16.msra.mxu0 %v158
    %178 = vmatpush.bf16.msra.mxu0 %v157
    %179 = vmatpush.bf16.msra.mxu0 %v156
    %180 = vmatmul.bf16.gmra.mxu0 %v101
    %v181 = vpop.f32.mrf.mxu0
    %v182 = vadd.f32 %v122, %v181
    %v183 = vpop.f32.mrf.mxu0
    %184 = vdwg.mxu0
    %v185 = vtanh.pop %v182
    %v186 = vpack.c.bf16 %v185, %v185
    %s187 = scalar_lea.vmem [#allocation5], 128
    %v188 = vld [vmem:[%s187] sm:$0xf]
    %v189 = vld [vmem:[%s187 + $0x4] sm:$0xf]
    %v190 = vld [vmem:[%s187 + $0x8] sm:$0xf]
    %v191 = vld [vmem:[%s187 + $0xc] sm:$0xf]
    %v192 = vld [vmem:[%s187 + $0x10] sm:$0xf]
    %v193 = vld [vmem:[%s187 + $0x14] sm:$0xf]
    %v194 = vld [vmem:[%s187 + $0x18] sm:$0xf]
    %v195 = vld [vmem:[%s187 + $0x1c] sm:$0xf]
    %v196 = vld [vmem:[%s187 + $0x20] sm:$0xf]
    %v197 = vld [vmem:[%s187 + $0x24] sm:$0xf]
    %v198 = vld [vmem:[%s187 + $0x28] sm:$0xf]
    %v199 = vld [vmem:[%s187 + $0x2c] sm:$0xf]
    %v200 = vld [vmem:[%s187 + $0x30] sm:$0xf]
    %v201 = vld [vmem:[%s187 + $0x34] sm:$0xf]
    %v202 = vld [vmem:[%s187 + $0x38] sm:$0xf]
    %v203 = vld [vmem:[%s187 + $0x3c] sm:$0xf]
    %s204 = scalar_lea.vmem [#allocation7], 2
    %v205 = vld [vmem:[%s204] sm:$0x1]
    %v207 = vperm.slane %v205, 0
    %v225 = vunpack.c.l.b16 %v188
    %v226 = vunpack.c.l.b16 %v189
    %v227 = vunpack.c.l.b16 %v190
    %v228 = vunpack.c.l.b16 %v191
    %v229 = vunpack.c.l.b16 %v192
    %v230 = vunpack.c.l.b16 %v193
    %v231 = vunpack.c.l.b16 %v194
    %v232 = vunpack.c.l.b16 %v195
    %v233 = vunpack.c.l.b16 %v196
    %v234 = vunpack.c.l.b16 %v197
    %v235 = vunpack.c.l.b16 %v198
    %v236 = vunpack.c.l.b16 %v199
    %v237 = vunpack.c.l.b16 %v200
    %v238 = vunpack.c.l.b16 %v201
    %v239 = vunpack.c.l.b16 %v202
    %v240 = vunpack.c.l.b16 %v203
    %v241 = vpack.c.b16 %v226, %v225
    %v242 = vpack.c.b16 %v228, %v227
    %v243 = vpack.c.b16 %v230, %v229
    %v244 = vpack.c.b16 %v232, %v231
    %v245 = vpack.c.b16 %v234, %v233
    %v246 = vpack.c.b16 %v236, %v235
    %v247 = vpack.c.b16 %v238, %v237
    %v248 = vpack.c.b16 %v240, %v239
    %257 = vmatpush.bf16.msra.mxu0 %v248
    %258 = vmatpush.bf16.msra.mxu0 %v247
    %259 = vmatpush.bf16.msra.mxu0 %v246
    %260 = vmatpush.bf16.msra.mxu0 %v245
    %261 = vmatpush.bf16.msra.mxu0 %v244
    %262 = vmatpush.bf16.msra.mxu0 %v243
    %263 = vmatpush.bf16.msra.mxu0 %v242
    %264 = vmatpush.bf16.msra.mxu0 %v241
    %265 = vmatmul.bf16.gmra.mxu0 %v186
    %v266 = vpop.f32.mrf.mxu0
    %v267 = vadd.f32 %v207, %v266
    %v268 = vpop.f32.mrf.mxu0
    %269 = vdwg.mxu0
    %v270 = vtanh.pop %v267
    %v271 = vpack.c.bf16 %v270, %v270
    %s272 = scalar_lea.vmem [#allocation5], 192
    %v273 = vld [vmem:[%s272] sm:$0xf]
    %v274 = vld [vmem:[%s272 + $0x4] sm:$0xf]
    %v275 = vld [vmem:[%s272 + $0x8] sm:$0xf]
    %v276 = vld [vmem:[%s272 + $0xc] sm:$0xf]
    %v277 = vld [vmem:[%s272 + $0x10] sm:$0xf]
    %v278 = vld [vmem:[%s272 + $0x14] sm:$0xf]
    %v279 = vld [vmem:[%s272 + $0x18] sm:$0xf]
    %v280 = vld [vmem:[%s272 + $0x1c] sm:$0xf]
    %v281 = vld [vmem:[%s272 + $0x20] sm:$0xf]
    %v282 = vld [vmem:[%s272 + $0x24] sm:$0xf]
    %v283 = vld [vmem:[%s272 + $0x28] sm:$0xf]
    %v284 = vld [vmem:[%s272 + $0x2c] sm:$0xf]
    %v285 = vld [vmem:[%s272 + $0x30] sm:$0xf]
    %v286 = vld [vmem:[%s272 + $0x34] sm:$0xf]
    %v287 = vld [vmem:[%s272 + $0x38] sm:$0xf]
    %v288 = vld [vmem:[%s272 + $0x3c] sm:$0xf]
    %s289 = scalar_lea.vmem [#allocation7], 3
    %v290 = vld [vmem:[%s289] sm:$0x1]
    %v292 = vperm.slane %v290, 0
    %v310 = vunpack.c.l.b16 %v273
    %v311 = vunpack.c.l.b16 %v274
    %v312 = vunpack.c.l.b16 %v275
    %v313 = vunpack.c.l.b16 %v276
    %v314 = vunpack.c.l.b16 %v277
    %v315 = vunpack.c.l.b16 %v278
    %v316 = vunpack.c.l.b16 %v279
    %v317 = vunpack.c.l.b16 %v280
    %v318 = vunpack.c.l.b16 %v281
    %v319 = vunpack.c.l.b16 %v282
    %v320 = vunpack.c.l.b16 %v283
    %v321 = vunpack.c.l.b16 %v284
    %v322 = vunpack.c.l.b16 %v285
    %v323 = vunpack.c.l.b16 %v286
    %v324 = vunpack.c.l.b16 %v287
    %v325 = vunpack.c.l.b16 %v288
    %v326 = vpack.c.b16 %v311, %v310
    %v327 = vpack.c.b16 %v313, %v312
    %v328 = vpack.c.b16 %v315, %v314
    %v329 = vpack.c.b16 %v317, %v316
    %v330 = vpack.c.b16 %v319, %v318
    %v331 = vpack.c.b16 %v321, %v320
    %v332 = vpack.c.b16 %v323, %v322
    %v333 = vpack.c.b16 %v325, %v324
    %342 = vmatpush.bf16.msra.mxu0 %v333
    %343 = vmatpush.bf16.msra.mxu0 %v332
    %344 = vmatpush.bf16.msra.mxu0 %v331
    %345 = vmatpush.bf16.msra.mxu0 %v330
    %346 = vmatpush.bf16.msra.mxu0 %v329
    %347 = vmatpush.bf16.msra.mxu0 %v328
    %348 = vmatpush.bf16.msra.mxu0 %v327
    %349 = vmatpush.bf16.msra.mxu0 %v326
    %350 = vmatmul.bf16.gmra.mxu0 %v271
    %v351 = vpop.f32.mrf.mxu0
    %v352 = vadd.f32 %v292, %v351
    %v353 = vpop.f32.mrf.mxu0
    %354 = vdwg.mxu0
    %355 = vst [vmem:[#allocation8] sm:$0x3] %v352
    // Predicated region
    $region26: #{tpu_custom_call.1} parent=1 // pred_check
      _
    $region27: #{tpu_custom_call.1} parent=1 // pred_check_branch
      %357 = sbr.rel (0) target = $region29
    $region28: #{tpu_custom_call.1} parent=1 // pred_region
      %359 = vsyncadd [#allocation4], 0
      %s361 = sshll.u32 [#allocation8], 4
      %s362 = int_to_ptr.vmem [resolvable:$true] %s361
      %s363 = sshll.u32 %s3, 4
      %s364 = int_to_ptr.hbm [resolvable:$true] %s363
      %366 = dma.vmem_to_hbm [thread:$0]  %s362, 32, %s364, [#allocation4]
    $region29: #{tpu_custom_call.1} parent=1 // pred_fallthru
      _
    // Predicated region
    $region30: #{tpu_custom_call.1} parent=1 // pred_check
      _
    $region31: #{tpu_custom_call.1} parent=1 // pred_check_branch
      %368 = sbr.rel (0) target = $region33
    $region32: #{tpu_custom_call.1} parent=1 // pred_region
      %370 = dma.done [#allocation4], 32
    $region33: #{tpu_custom_call.1} parent=1 // pred_fallthru
      _
    %371 = vsyncpa [#allocation3], 1
    %372 = vsyncpa [#allocation6], 1
    %373 = vsyncpa [#allocation4], 1

</llo_original>
